<compile_context>
chip_gen: v7x
topology: tpu7x:2x2x1
jax: 0.10.0
libtpu: 0.0.40
codegen_flags: <defaults>
</compile_context>

<pallas_src>
import numpy as np
import jax
import jax.numpy as jnp
from jax.experimental import pallas as pl
from jax.experimental.pallas import tpu as pltpu


def _grad_kernel(x_ref, up_ref, dn_ref, o_ref):
    """x_ref: (1,1,TH,W) row tile. up_ref/dn_ref: (1,1,HB,W) halo blocks whose
    last/first row is the row just above/below this tile. o_ref: (1,1,TH,W)."""
    t = pl.program_id(2)
    nt = pl.num_programs(2)

    x = x_ref[0, 0].astype(jnp.float32)            # (TH, W)
    th, w = x.shape
    hb = up_ref.shape[2]

    # Halo rows; zero them at the image boundary (conv2d zero padding).
    above = up_ref[0, 0, hb - 1:hb, :].astype(jnp.float32)   # global row t*TH - 1
    below = dn_ref[0, 0, 0:1, :].astype(jnp.float32)         # global row (t+1)*TH
    above = above * (t > 0).astype(jnp.float32)
    below = below * (t < nt - 1).astype(jnp.float32)

    # Vertical difference: v[i, j] = x[i+1, j] - x[i-1, j]
    if th > 1:
        x_dn = jnp.concatenate([x[1:, :], below], axis=0)    # x[i+1]
        x_up = jnp.concatenate([above, x[:-1, :]], axis=0)   # x[i-1]
    else:
        x_dn, x_up = below, above
    v = x_dn - x_up

    # Horizontal difference: h[i, j] = x[i, j+1] - x[i, j-1]
    zcol = jnp.zeros((th, 1), jnp.float32)
    if w > 1:
        x_rt = jnp.concatenate([x[:, 1:], zcol], axis=1)     # x[:, j+1]
        x_lt = jnp.concatenate([zcol, x[:, :-1]], axis=1)    # x[:, j-1]
    else:
        x_rt, x_lt = zcol, zcol
    h = x_rt - x_lt

    o_ref[0, 0] = jnp.sqrt(v * v + h * h + 1e-6).astype(o_ref.dtype)


def _pick_row_tile(H, W, itemsize, max_block_bytes=2 * 1024 * 1024):
    """Largest multiple-of-8 divisor of H whose (TH, W) tile fits the per-buffer
    budget; falls back to the whole plane for small / non-multiple-of-8 heights."""
    if H % 8 != 0 or H * W * itemsize <= max_block_bytes:
        return H
    max_rows = max(8, min(H, (max_block_bytes // max(W * itemsize, 1)) // 8 * 8))
    best = 8
    for th in range(8, max_rows + 1, 8):
        if H % th == 0:
            best = th
    return best


def get_gradient(x, row_block=None):
    """Pallas equivalent of Get_gradient.forward. x: (N, C, H, W), float."""
    N, C, H, W = x.shape
    if C != 1 and C < 3:
        # The torch module would index channel 2 and fail; make it explicit.
        raise ValueError(f"Get_gradient needs C == 1 or C >= 3, got C={C}")
    c_out = 1 if C == 1 else 3

    TH = _pick_row_tile(H, W, x.dtype.itemsize) if row_block is None else row_block
    if H % TH != 0 or (TH != H and TH % 8 != 0):
        raise ValueError(f"row tile {TH} must divide H={H} and be a multiple of 8")
    HB = min(8, H)                  # halo block height
    nt = H // TH                    # row tiles per plane
    hb_per_tile = TH // HB
    n_hblocks = pl.cdiv(H, HB)

    center = pl.BlockSpec((1, 1, TH, W), lambda n, c, t: (n, c, t, 0))
    up = pl.BlockSpec(
        (1, 1, HB, W),
        lambda n, c, t: (n, c, jnp.maximum(t * hb_per_tile - 1, 0), 0))
    dn = pl.BlockSpec(
        (1, 1, HB, W),
        lambda n, c, t: (n, c, jnp.minimum((t + 1) * hb_per_tile, n_hblocks - 1), 0))
    out = pl.BlockSpec((1, 1, TH, W), lambda n, c, t: (n, c, t, 0))

    return pl.pallas_call(
        _grad_kernel,
        out_shape=jax.ShapeDtypeStruct((N, c_out, H, W), x.dtype),
        grid=(N, c_out, nt),
        in_specs=[center, up, dn],
        out_specs=out,
        compiler_params=pltpu.CompilerParams(
            dimension_semantics=("parallel", "parallel", "parallel"),
            vmem_limit_bytes=48 * 1024 * 1024),
    )(x, x, x)


def _reference(x):
    """Pure-JAX reference reproducing the torch forward."""
    x = x.astype(jnp.float32)
    c_out = 1 if x.shape[1] == 1 else 3
    xp = jnp.pad(x[:, :c_out], ((0, 0), (0, 0), (1, 1), (1, 1)))
    v = xp[:, :, 2:, 1:-1] - xp[:, :, :-2, 1:-1]
    h = xp[:, :, 1:-1, 2:] - xp[:, :, 1:-1, :-2]
    return jnp.sqrt(v * v + h * h + 1e-6)


if __name__ == "__main__":
    # Multi-channel branch (C=4 -> first 3 channels, like the torch module).
    x = jax.random.normal(jax.random.PRNGKey(0), (2, 4, 16, 16), dtype=jnp.float32)
    out = get_gradient(x)
    jax.block_until_ready(out)
    ref = _reference(x)
    assert out.shape == ref.shape, (out.shape, ref.shape)
    np.testing.assert_allclose(np.asarray(out), np.asarray(ref), rtol=1e-5, atol=1e-5)

    # Single-channel branch.
    x1 = jax.random.normal(jax.random.PRNGKey(1), (2, 1, 16, 16), dtype=jnp.float32)
    out1 = get_gradient(x1)
    jax.block_until_ready(out1)
    np.testing.assert_allclose(np.asarray(out1), np.asarray(_reference(x1)),
                               rtol=1e-5, atol=1e-5)

    # Row-tiled path with halos (small forced row tile to exercise the logic).
    x2 = jax.random.normal(jax.random.PRNGKey(2), (1, 3, 64, 128), dtype=jnp.float32)
    out2 = get_gradient(x2, row_block=16)
    jax.block_until_ready(out2)
    np.testing.assert_allclose(np.asarray(out2), np.asarray(_reference(x2)),
                               rtol=1e-5, atol=1e-5)

    print("KERNEL_OK")
</pallas_src>

<mosaic_0001>
module attributes {stable_mosaic.version = 11 : i64} {
  func.func @_grad_kernel(%arg0: i32, %arg1: i32, %arg2: i32, %arg3: memref<1x1x16x16xf32, #tpu.memory_space<vmem>>, %arg4: memref<1x1x8x16xf32, #tpu.memory_space<vmem>>, %arg5: memref<1x1x8x16xf32, #tpu.memory_space<vmem>>, %arg6: memref<1x1x16x16xf32, #tpu.memory_space<vmem>>) attributes {dimension_semantics = [#tpu.dimension_semantics<parallel>, #tpu.dimension_semantics<parallel>, #tpu.dimension_semantics<parallel>], iteration_bounds = array<i64: 2, 3, 1>, scalar_prefetch = 0 : i64, scratch_operands = 0 : i64, tpu.core_type = #tpu.core_type<tc>, window_params = [{transform_indices = @transform_0, window_bounds = array<i64: 1, 1, 16, 16>}, {transform_indices = @transform_1, window_bounds = array<i64: 1, 1, 8, 16>}, {transform_indices = @transform_2, window_bounds = array<i64: 1, 1, 8, 16>}, {transform_indices = @transform_3, window_bounds = array<i64: 1, 1, 16, 16>}]} {
    %c0 = arith.constant 0 : index
    %c0_0 = arith.constant 0 : index
    %c0_1 = arith.constant 0 : index
    %c0_2 = arith.constant 0 : index
    %0 = vector.load %arg3[%c0, %c0_0, %c0_1, %c0_2] : memref<1x1x16x16xf32, #tpu.memory_space<vmem>>, vector<1x1x16x16xf32>
    %1 = vector.shape_cast %0 : vector<1x1x16x16xf32> to vector<16x16xf32>
    %c0_3 = arith.constant 0 : index
    %c0_4 = arith.constant 0 : index
    %c7 = arith.constant 7 : index
    %c0_5 = arith.constant 0 : index
    %2 = vector.load %arg4[%c0_3, %c0_4, %c7, %c0_5] : memref<1x1x8x16xf32, #tpu.memory_space<vmem>>, vector<1x1x1x16xf32>
    %3 = vector.shape_cast %2 : vector<1x1x1x16xf32> to vector<1x16xf32>
    %c0_6 = arith.constant 0 : index
    %c0_7 = arith.constant 0 : index
    %c0_8 = arith.constant 0 : index
    %c0_9 = arith.constant 0 : index
    %4 = vector.load %arg5[%c0_6, %c0_7, %c0_8, %c0_9] : memref<1x1x8x16xf32, #tpu.memory_space<vmem>>, vector<1x1x1x16xf32>
    %5 = vector.shape_cast %4 : vector<1x1x1x16xf32> to vector<1x16xf32>
    %c0_i32 = arith.constant 0 : i32
    %6 = arith.cmpi sgt, %arg2, %c0_i32 : i32
    %7 = arith.extui %6 : i1 to i32
    %8 = arith.sitofp %7 : i32 to f32
    %9 = vector.broadcast %8 : f32 to vector<1x16xf32>
    %10 = arith.mulf %3, %9 : vector<1x16xf32>
    %c0_i32_10 = arith.constant 0 : i32
    %11 = arith.cmpi slt, %arg2, %c0_i32_10 : i32
    %12 = arith.extui %11 : i1 to i32
    %13 = arith.sitofp %12 : i32 to f32
    %14 = vector.broadcast %13 : f32 to vector<1x16xf32>
    %15 = arith.mulf %5, %14 : vector<1x16xf32>
    %16 = vector.extract_strided_slice %1 {offsets = [1, 0], sizes = [15, 16], strides = [1, 1]} : vector<16x16xf32> to vector<15x16xf32>
    %17 = tpu.concatenate %16, %15 in 0 : vector<15x16xf32>, vector<1x16xf32> -> vector<16x16xf32>
    %18 = vector.extract_strided_slice %1 {offsets = [0, 0], sizes = [15, 16], strides = [1, 1]} : vector<16x16xf32> to vector<15x16xf32>
    %19 = tpu.concatenate %10, %18 in 0 : vector<1x16xf32>, vector<15x16xf32> -> vector<16x16xf32>
    %20 = arith.subf %17, %19 : vector<16x16xf32>
    %cst = arith.constant 0.000000e+00 : f32
    %21 = vector.broadcast %cst : f32 to vector<16x1xf32>
    %22 = vector.extract_strided_slice %1 {offsets = [0, 1], sizes = [16, 15], strides = [1, 1]} : vector<16x16xf32> to vector<16x15xf32>
    %23 = tpu.concatenate %22, %21 in 1 : vector<16x15xf32>, vector<16x1xf32> -> vector<16x16xf32>
    %24 = vector.extract_strided_slice %1 {offsets = [0, 0], sizes = [16, 15], strides = [1, 1]} : vector<16x16xf32> to vector<16x15xf32>
    %25 = tpu.concatenate %21, %24 in 1 : vector<16x1xf32>, vector<16x15xf32> -> vector<16x16xf32>
    %26 = arith.subf %23, %25 : vector<16x16xf32>
    %27 = arith.mulf %20, %20 : vector<16x16xf32>
    %28 = arith.mulf %26, %26 : vector<16x16xf32>
    %29 = arith.addf %27, %28 : vector<16x16xf32>
    %cst_11 = arith.constant 9.99999997E-7 : f32
    %30 = vector.broadcast %cst_11 : f32 to vector<16x16xf32>
    %31 = arith.addf %29, %30 : vector<16x16xf32>
    %32 = math.sqrt %31 : vector<16x16xf32>
    %c0_12 = arith.constant 0 : index
    %c0_13 = arith.constant 0 : index
    %c0_14 = arith.constant 0 : index
    %c0_15 = arith.constant 0 : index
    %33 = vector.load %arg6[%c0_12, %c0_13, %c0_14, %c0_15] : memref<1x1x16x16xf32, #tpu.memory_space<vmem>>, vector<1x1x16x16xf32>
    %34 = vector.shape_cast %33 : vector<1x1x16x16xf32> to vector<16x16xf32>
    %35 = vector.shape_cast %32 : vector<16x16xf32> to vector<1x1x16x16xf32>
    tpu.vector_store %arg6[%c0_12, %c0_13, %c0_14, %c0_15], %35 {strides = array<i32>} : memref<1x1x16x16xf32, #tpu.memory_space<vmem>>, vector<1x1x16x16xf32>,
    return
  }
  func.func @transform_0(%arg0: i32, %arg1: i32, %arg2: i32) -> (i32, i32, i32, i32) {
    %c0_i32 = arith.constant 0 : i32
    %c0_i32_0 = arith.constant 0 : i32
    return %arg0, %arg1, %arg2, %c0_i32 : i32, i32, i32, i32
  }
  func.func @transform_1(%arg0: i32, %arg1: i32, %arg2: i32) -> (i32, i32, i32, i32) {
    %c2_i32 = arith.constant 2 : i32
    %0 = arith.muli %arg2, %c2_i32 : i32
    %c1_i32 = arith.constant 1 : i32
    %1 = arith.subi %0, %c1_i32 : i32
    %c0_i32 = arith.constant 0 : i32
    %2 = arith.maxsi %1, %c0_i32 : i32
    %c0_i32_0 = arith.constant 0 : i32
    %c0_i32_1 = arith.constant 0 : i32
    return %arg0, %arg1, %2, %c0_i32_0 : i32, i32, i32, i32
  }
  func.func @transform_2(%arg0: i32, %arg1: i32, %arg2: i32) -> (i32, i32, i32, i32) {
    %c1_i32 = arith.constant 1 : i32
    %0 = arith.addi %arg2, %c1_i32 : i32
    %c2_i32 = arith.constant 2 : i32
    %1 = arith.muli %0, %c2_i32 : i32
    %c1_i32_0 = arith.constant 1 : i32
    %2 = arith.minsi %1, %c1_i32_0 : i32
    %c0_i32 = arith.constant 0 : i32
    %c0_i32_1 = arith.constant 0 : i32
    return %arg0, %arg1, %2, %c0_i32 : i32, i32, i32, i32
  }
  func.func @transform_3(%arg0: i32, %arg1: i32, %arg2: i32) -> (i32, i32, i32, i32) {
    %c0_i32 = arith.constant 0 : i32
    %c0_i32_0 = arith.constant 0 : i32
    return %arg0, %arg1, %arg2, %c0_i32 : i32, i32, i32, i32
  }
}

</mosaic_0001>

<llo_original>
// kernel: tpu_custom_call.1
$region0: #{tpu_custom_call.1}
  #allocation0 [shape = 'u32[]', space=smem, size = 0x4, offset = 0x4, fixed_abs, tag = 'smem constant byte address 0x4 - core index']
  #allocation1 [shape = 'u32[144,128]{1,0:T(1,128)}', space=vmem, size = 0x12000, scoped, tag = 'internal scratch']
  %s0 = inlined_call_operand.hbm [shape: f32[2,4,16,16], index: 0, kind: input, shape index: {}]
  %s1 = inlined_call_operand.hbm [shape: f32[2,4,16,16], index: 1, kind: input, shape index: {}]
  %s2 = inlined_call_operand.hbm [shape: f32[2,4,16,16], index: 2, kind: input, shape index: {}]
  %s3 = inlined_call_operand.hbm [shape: f32[2,3,16,16], index: 3, kind: output, shape index: {}]
  %s4 = sld [smem:[#allocation0]]
  $region57: #{tpu_custom_call.1} parent=0
    _
  %s6 = ssub.s32 1, %s4
  %s7 = scalar_select 0, %s6, %s4
  $region1: #{tpu_custom_call.1} parent=0
    #allocation2 [shape = 'u8[16384]{0}', space=vmem, size = 0x4000, scoped, tag = 'input window, operand 0']
    #allocation3 [shape = 's32[2]{0}', space=sflag, size = 0x8, scoped, tag = 'scoped memory for tpu_custom_call.1']
    #allocation4 [shape = 's32[2]{0}', space=sflag, size = 0x8, scoped, tag = 'scoped memory for tpu_custom_call.1']
    #allocation5 [shape = 'u8[8192]{0}', space=vmem, size = 0x2000, scoped, tag = 'input window, operand 1']
    #allocation6 [shape = 's32[2]{0}', space=sflag, size = 0x8, scoped, tag = 'scoped memory for tpu_custom_call.1']
    #allocation7 [shape = 'u8[8192]{0}', space=vmem, size = 0x2000, scoped, tag = 'input window, operand 2']
    #allocation8 [shape = 'u8[16384]{0}', space=vmem, size = 0x4000, scoped, tag = 'output window, operand 0']
    %8 = vsyncpa [#allocation3], 0
    %s9 = scalar_lea.sflag [#allocation3], 1
    %10 = vsyncpa %s9, 0
    %11 = vsyncpa [#allocation6], 0
    %s12 = scalar_lea.sflag [#allocation6], 1
    %13 = vsyncpa %s12, 0
    %14 = vsyncpa [#allocation4], 0
    %s15 = scalar_lea.sflag [#allocation4], 1
    %16 = vsyncpa %s15, 0
    loop: start=0, step=1, limit=8
    $region2: #{tpu_custom_call.1} parent=1 // loop_pre_header
      _
    $region3: #{tpu_custom_call.1} parent=1 // loop_header
      %s18 = sphi 0, %s22
      %p19 = scmp.ge.s32.totalorder %s18, 8
      %s25 = sphi 0, %s44
      %s26 = sphi 0, %s40
      %s27 = sphi 0, %s36
      %s28 = sphi 0, %s25
      %s29 = sphi 0, %s26
      %s30 = sphi 0, %s27
      %s31 = sphi 0, %s28
      %s32 = sphi 0, %s29
      %s33 = sphi 0, %s30
      %s51 = sphi 0, %s53
      %s54 = sphi 0, %s51
      %s55 = sphi 0, %s54
      %s71 = sphi 0, %s55
      %s89 = sphi 0, %s91
      %s92 = sphi 0, %s89
      %s93 = sphi 0, %s92
      %s109 = sphi 0, %s93
      %s127 = sphi 0, %s129
      %s130 = sphi 0, %s127
      %s131 = sphi 0, %s130
      %s147 = sphi 0, %s131
      %s157 = sphi 0, %s159
      %s160 = sphi 0, %s157
      %s161 = sphi 0, %s160
      %s177 = sphi 0, %s161
    $region4: #{tpu_custom_call.1} parent=1 // loop_header_branch
      %21 = sbr.rel (%p19) target = $region8
    $region5: #{tpu_custom_call.1} parent=1 // loop_body
      %s23 = ssub.s32 %s18, 1
      %s24 = ssub.s32 %s18, 2
      %s34 = sadd.s32 1, %s27
      %p35 = scmp.ge.s32.totalorder %s34, 1
      %s36 = scalar_select %p35, 0, %s34
      %s37 = sadd.s32 1, %s26
      %s38 = scalar_select %p35, %s37, %s26
      %p39 = scmp.ge.s32.totalorder %s38, 3
      %s40 = scalar_select %p39, 0, %s38
      %s41 = sadd.s32 1, %s25
      %s42 = scalar_select %p39, %s41, %s25
      %p43 = scmp.ge.s32.totalorder %s42, 2
      %s44 = scalar_select %p43, 0, %s42
      %s45 = ssub.s32 %s25, %s44
      %s46 = ssub.s32 %s26, %s40
      %s47 = sor.u32 %s45, %s46
      %s48 = ssub.s32 %s27, %s36
      %s49 = sor.u32 %s47, %s48
      %p50 = scmp.eq.s32.totalorder %s49, 0
      %s52 = sadd.s32 %s51, 1
      %s53 = scalar_select %p50, %s51, %s52
      %p56 = pneg %p50
      %p57 = scmp.eq.s32.totalorder %s18, 5
      %p58 = por %p56, %p57
      %p59 = scmp.ne.s32.totalorder %s51, %s54
      %p60 = scmp.eq.s32.totalorder %s18, 0
      %p61 = por %p59, %p60
      %p62 = scmp.ne.s32.totalorder %s51, %s54
      %p63 = scmp.eq.s32.totalorder %s23, 5
      %p64 = por %p62, %p63
      %p65 = scmp.ne.s32.totalorder %s54, %s55
      %p66 = scmp.eq.s32.totalorder %s23, 0
      %p67 = por %p65, %p66
      %p68 = scmp.ne.s32.totalorder %s54, %s55
      %p69 = scmp.eq.s32.totalorder %s24, 5
      %p70 = por %p68, %p69
      %p72 = scmp.ne.s32.totalorder %s55, %s71
      %p73 = scmp.eq.s32.totalorder %s24, 0
      %p74 = por %p72, %p73
      %s75 = smul.u32 %s27, 2
      %s76 = ssub.s32 %s75, 1
      %p77 = scmp.gt.s32.totalorder %s76, 0
      %s78 = scalar_select %p77, %s76, 0
      %s79 = smul.u32 %s36, 2
      %s80 = ssub.s32 %s79, 1
      %p81 = scmp.gt.s32.totalorder %s80, 0
      %s82 = scalar_select %p81, %s80, 0
      %s83 = ssub.s32 %s25, %s44
      %s84 = ssub.s32 %s26, %s40
      %s85 = sor.u32 %s83, %s84
      %s86 = ssub.s32 %s78, %s82
      %s87 = sor.u32 %s85, %s86
      %p88 = scmp.eq.s32.totalorder %s87, 0
      %s90 = sadd.s32 %s89, 1
      %s91 = scalar_select %p88, %s89, %s90
      %p94 = pneg %p88
      %p95 = scmp.eq.s32.totalorder %s18, 5
      %p96 = por %p94, %p95
      %p97 = scmp.ne.s32.totalorder %s89, %s92
      %p98 = scmp.eq.s32.totalorder %s18, 0
      %p99 = por %p97, %p98
      %p100 = scmp.ne.s32.totalorder %s89, %s92
      %p101 = scmp.eq.s32.totalorder %s23, 5
      %p102 = por %p100, %p101
      %p103 = scmp.ne.s32.totalorder %s92, %s93
      %p104 = scmp.eq.s32.totalorder %s23, 0
      %p105 = por %p103, %p104
      %p106 = scmp.ne.s32.totalorder %s92, %s93
      %p107 = scmp.eq.s32.totalorder %s24, 5
      %p108 = por %p106, %p107
      %p110 = scmp.ne.s32.totalorder %s93, %s109
      %p111 = scmp.eq.s32.totalorder %s24, 0
      %p112 = por %p110, %p111
      %s113 = sadd.s32 %s27, 1
      %s114 = smul.u32 %s113, 2
      %p115 = scmp.lt.s32.totalorder %s114, 1
      %s116 = scalar_select %p115, %s114, 1
      %s117 = sadd.s32 %s36, 1
      %s118 = smul.u32 %s117, 2
      %p119 = scmp.lt.s32.totalorder %s118, 1
      %s120 = scalar_select %p119, %s118, 1
      %s121 = ssub.s32 %s25, %s44
      %s122 = ssub.s32 %s26, %s40
      %s123 = sor.u32 %s121, %s122
      %s124 = ssub.s32 %s116, %s120
      %s125 = sor.u32 %s123, %s124
      %p126 = scmp.eq.s32.totalorder %s125, 0
      %s128 = sadd.s32 %s127, 1
      %s129 = scalar_select %p126, %s127, %s128
      %p132 = pneg %p126
      %p133 = scmp.eq.s32.totalorder %s18, 5
      %p134 = por %p132, %p133
      %p135 = scmp.ne.s32.totalorder %s127, %s130
      %p136 = scmp.eq.s32.totalorder %s18, 0
      %p137 = por %p135, %p136
      %p138 = scmp.ne.s32.totalorder %s127, %s130
      %p139 = scmp.eq.s32.totalorder %s23, 5
      %p140 = por %p138, %p139
      %p141 = scmp.ne.s32.totalorder %s130, %s131
      %p142 = scmp.eq.s32.totalorder %s23, 0
      %p143 = por %p141, %p142
      %p144 = scmp.ne.s32.totalorder %s130, %s131
      %p145 = scmp.eq.s32.totalorder %s24, 5
      %p146 = por %p144, %p145
      %p148 = scmp.ne.s32.totalorder %s131, %s147
      %p149 = scmp.eq.s32.totalorder %s24, 0
      %p150 = por %p148, %p149
      %s151 = ssub.s32 %s25, %s44
      %s152 = ssub.s32 %s26, %s40
      %s153 = sor.u32 %s151, %s152
      %s154 = ssub.s32 %s27, %s36
      %s155 = sor.u32 %s153, %s154
      %p156 = scmp.eq.s32.totalorder %s155, 0
      %s158 = sadd.s32 %s157, 1
      %s159 = scalar_select %p156, %s157, %s158
      %p162 = pneg %p156
      %p163 = scmp.eq.s32.totalorder %s18, 5
      %p164 = por %p162, %p163
      %p165 = scmp.ne.s32.totalorder %s157, %s160
      %p166 = scmp.eq.s32.totalorder %s18, 0
      %p167 = por %p165, %p166
      %p168 = scmp.ne.s32.totalorder %s157, %s160
      %p169 = scmp.eq.s32.totalorder %s23, 5
      %p170 = por %p168, %p169
      %p171 = scmp.ne.s32.totalorder %s160, %s161
      %p172 = scmp.eq.s32.totalorder %s23, 0
      %p173 = por %p171, %p172
      %p174 = scmp.ne.s32.totalorder %s160, %s161
      %p175 = scmp.eq.s32.totalorder %s24, 5
      %p176 = por %p174, %p175
      %p178 = scmp.ne.s32.totalorder %s161, %s177
      %p179 = scmp.eq.s32.totalorder %s24, 0
      %p180 = por %p178, %p179
      %p181 = scmp.le.s32.totalorder 1, %s18
      %p182 = scmp.lt.s32.totalorder %s18, 7
      %p183 = pnand %p181, %p182
      %p184 = pneg %p183
      // Predicated region
      $region9: #{tpu_custom_call.1} parent=5 // pred_check
        _
      $region10: #{tpu_custom_call.1} parent=5 // pred_check_branch
        %186 = sbr.rel (%p183) target = $region12
      $region11: #{tpu_custom_call.1} parent=5 // pred_region
        %s187 = ssub.s32 %s18, 1
      $region12: #{tpu_custom_call.1} parent=5 // pred_fallthru
        _
      %p188 = scmp.lt.s32.totalorder %s18, 6
      // Predicated region
      $region13: #{tpu_custom_call.1} parent=5 // pred_check
        %p189 = pneg %p188
      $region14: #{tpu_custom_call.1} parent=5 // pred_check_branch
        %191 = sbr.rel (%p189) target = $region16
      $region15: #{tpu_custom_call.1} parent=5 // pred_region
        // Predicated region
        $region17: #{tpu_custom_call.1} parent=15 // pred_check
          %p192 = pneg %p61
        $region18: #{tpu_custom_call.1} parent=15 // pred_check_branch
          %194 = sbr.rel (%p192) target = $region20
        $region19: #{tpu_custom_call.1} parent=15 // pred_region
          %s195 = sand.u32 %s51, 1
          %s196 = scalar_lea.sflag [#allocation3], %s195
          %s197 = sand.u32 %s51, 1
          %s198 = smul.addr %s197, 16
          %s199 = scalar_lea.vmem [#allocation2], %s198
          %s200 = smul.u32 2, %s27
          %s202 = ssub.s32 256, 256
          %203 = vsyncadd %s196, %s202
          %s204 = smul.addr %s26, 2
          %s205 = sadd.s32 %s200, %s204
          %s206 = smul.addr %s25, 8
          %s207 = sadd.s32 %s205, %s206
          %s208 = smul.addr %s207, 128
          %s209 = scalar_lea.hbm %s0, %s208
          %s210 = sshll.u32 %s199, 4
          %s211 = int_to_ptr.vmem [resolvable:$true] %s210
          %216 = dma.hbm_to_vmem [thread:$0]  %s209, 256, %s211, %s196, 128, 128, 8
        $region20: #{tpu_custom_call.1} parent=15 // pred_fallthru
          _
        // Predicated region
        $region21: #{tpu_custom_call.1} parent=15 // pred_check
          %p217 = pneg %p99
        $region22: #{tpu_custom_call.1} parent=15 // pred_check_branch
          %219 = sbr.rel (%p217) target = $region24
        $region23: #{tpu_custom_call.1} parent=15 // pred_region
          %s220 = sand.u32 %s18, 1
          %s221 = scalar_lea.sflag [#allocation6], %s220
          %s222 = sand.u32 %s89, 1
          %s223 = smul.addr %s222, 8
          %s224 = scalar_lea.vmem [#allocation5], %s223
          %s225 = smul.u32 %s27, 2
          %s226 = ssub.s32 %s225, 1
          %p227 = scmp.gt.s32.totalorder %s226, 0
          %s228 = scalar_select %p227, %s226, 0
          %s230 = ssub.s32 128, 128
          %231 = vsyncadd %s221, %s230
          %s232 = smul.addr %s26, 2
          %s233 = sadd.s32 %s228, %s232
          %s234 = smul.addr %s25, 8
          %s235 = sadd.s32 %s233, %s234
          %s236 = smul.addr %s235, 128
          %s237 = scalar_lea.hbm %s1, %s236
          %s239 = sshll.u32 %s224, 4
          %s240 = int_to_ptr.vmem [resolvable:$true] %s239
          %242 = dma.hbm_to_vmem [thread:$0]  %s237, 128, %s240, %s221
        $region24: #{tpu_custom_call.1} parent=15 // pred_fallthru
          _
        // Predicated region
        $region25: #{tpu_custom_call.1} parent=15 // pred_check
          %p243 = pneg %p137
        $region26: #{tpu_custom_call.1} parent=15 // pred_check_branch
          %245 = sbr.rel (%p243) target = $region28
        $region27: #{tpu_custom_call.1} parent=15 // pred_region
          %s246 = sand.u32 %s18, 1
          %s247 = scalar_lea.sflag [#allocation6], %s246
          %s248 = sand.u32 %s127, 1
          %s249 = smul.addr %s248, 8
          %s250 = scalar_lea.vmem [#allocation7], %s249
          %s251 = sadd.s32 %s27, 1
          %s252 = smul.u32 %s251, 2
          %p253 = scmp.lt.s32.totalorder %s252, 1
          %s254 = scalar_select %p253, %s252, 1
          %s256 = ssub.s32 128, 128
          %257 = vsyncadd %s247, %s256
          %s258 = smul.addr %s26, 2
          %s259 = sadd.s32 %s254, %s258
          %s260 = smul.addr %s25, 8
          %s261 = sadd.s32 %s259, %s260
          %s262 = smul.addr %s261, 128
          %s263 = scalar_lea.hbm %s2, %s262
          %s265 = sshll.u32 %s250, 4
          %s266 = int_to_ptr.vmem [resolvable:$true] %s265
          %268 = dma.hbm_to_vmem [thread:$0]  %s263, 128, %s266, %s247
        $region28: #{tpu_custom_call.1} parent=15 // pred_fallthru
          _
      $region16: #{tpu_custom_call.1} parent=5 // pred_fallthru
        _
      %p269 = scmp.le.s32.totalorder 1, %s18
      %p270 = scmp.lt.s32.totalorder %s18, 7
      %p271 = pnand %p269, %p270
      %p272 = pneg %p271
      // Predicated region
      $region29: #{tpu_custom_call.1} parent=5 // pred_check
        _
      $region30: #{tpu_custom_call.1} parent=5 // pred_check_branch
        %274 = sbr.rel (%p271) target = $region32
      $region31: #{tpu_custom_call.1} parent=5 // pred_region
        %s275 = ssub.s32 %s18, 1
        %s276 = sand.u32 %s54, 1
        %s277 = scalar_lea.sflag [#allocation3], %s276
        %s278 = sand.u32 %s54, 1
        %s279 = smul.addr %s278, 16
        %s280 = scalar_lea.vmem [#allocation2], %s279
        // Predicated region
        $region33: #{tpu_custom_call.1} parent=31 // pred_check
          %p281 = pneg %p67
        $region34: #{tpu_custom_call.1} parent=31 // pred_check_branch
          %283 = sbr.rel (%p281) target = $region36
        $region35: #{tpu_custom_call.1} parent=31 // pred_region
          %284 = dma.done %s277, 256
        $region36: #{tpu_custom_call.1} parent=31 // pred_fallthru
          _
        %s285 = sand.u32 %s23, 1
        %s286 = scalar_lea.sflag [#allocation6], %s285
        %s287 = sand.u32 %s92, 1
        %s288 = smul.addr %s287, 8
        %s289 = scalar_lea.vmem [#allocation5], %s288
        // Predicated region
        $region37: #{tpu_custom_call.1} parent=31 // pred_check
          %p290 = pneg %p105
        $region38: #{tpu_custom_call.1} parent=31 // pred_check_branch
          %292 = sbr.rel (%p290) target = $region40
        $region39: #{tpu_custom_call.1} parent=31 // pred_region
          %293 = dma.done %s286, 128
        $region40: #{tpu_custom_call.1} parent=31 // pred_fallthru
          _
        %s294 = sand.u32 %s23, 1
        %s295 = scalar_lea.sflag [#allocation6], %s294
        %s296 = sand.u32 %s130, 1
        %s297 = smul.addr %s296, 8
        %s298 = scalar_lea.vmem [#allocation7], %s297
        // Predicated region
        $region41: #{tpu_custom_call.1} parent=31 // pred_check
          %p299 = pneg %p143
        $region42: #{tpu_custom_call.1} parent=31 // pred_check_branch
          %301 = sbr.rel (%p299) target = $region44
        $region43: #{tpu_custom_call.1} parent=31 // pred_region
          %302 = dma.done %s295, 128
        $region44: #{tpu_custom_call.1} parent=31 // pred_fallthru
          _
        %s303 = sand.u32 %s54, 1
        %s304 = scalar_lea.sflag [#allocation3], %s303
        %s305 = sand.u32 %s54, 1
        %s306 = smul.addr %s305, 16
        %s307 = scalar_lea.vmem [#allocation2], %s306
        %p308 = pneg %p67
        %p309 = pneg %p64
        %s310 = sand.u32 %s23, 1
        %s311 = scalar_lea.sflag [#allocation6], %s310
        %s312 = sand.u32 %s92, 1
        %s313 = smul.addr %s312, 8
        %s314 = scalar_lea.vmem [#allocation5], %s313
        %p315 = pneg %p105
        %p316 = pneg %p102
        %s317 = sand.u32 %s23, 1
        %s318 = scalar_lea.sflag [#allocation6], %s317
        %s319 = sand.u32 %s130, 1
        %s320 = smul.addr %s319, 8
        %s321 = scalar_lea.vmem [#allocation7], %s320
        %p322 = pneg %p143
        %p323 = pneg %p140
        %p324 = pneg %p173
        %p325 = pneg %p170
        %s326 = sand.u32 %s160, 1
        %s327 = scalar_lea.sflag [#allocation4], %s326
        %s328 = sand.u32 %s160, 1
        %s329 = smul.addr %s328, 16
        %s330 = scalar_lea.vmem [#allocation8], %s329
        %s331 = smul.u32 2, %s30
        %s332 = smul.u32 %s30, 2
        %s333 = ssub.s32 %s332, 1
        %p334 = scmp.gt.s32.totalorder %s333, 0
        %s335 = scalar_select %p334, %s333, 0
        %s336 = sadd.s32 %s30, 1
        %s337 = smul.u32 %s336, 2
        %p338 = scmp.lt.s32.totalorder %s337, 1
        %s339 = scalar_select %p338, %s337, 1
        %s340 = smul.u32 2, %s30
        %v341 = vld [vmem:[%s280] sm:$0xff]
        %v342 = vld [vmem:[%s280 + $0x8] sm:$0xff]
        %v343 = vld [vmem:[%s289 + $0x7] sm:$0x1]
        %v344 = vld [vmem:[%s298] sm:$0x1]
        %p345 = scmp.gt.s32.totalorder %s30, 0
        %s346 = scalar_select %p345, 1, 0
        %s347 = scvt.s32.f32 %s346
        %v348 = vstv %s347
        %v349 = vmul.f32 %v343, %v348
        %p350 = scmp.lt.s32.totalorder %s30, 0
        %s351 = scalar_select %p350, 1, 0
        %s352 = scvt.s32.f32 %s351
        %v353 = vstv %s352
        %v354 = vmul.f32 %v344, %v353
        %vm357 = vcmask 1046528
        %v358 = vrot.slane %v341, 1
        %v359 = vrot.slane %v342, 1
        %v360 = vsel %vm357, %v358, %v359
        %v364 = vrot.slane %v354, 1
        %v366 = vsel %vm357, %v359, %v364
        %vm367 = vcmask 1040384
        %v368 = vrot.slane %v341, 7
        %v369 = vrot.slane %v342, 7
        %v370 = vsel %vm367, %v368, %v369
        %v373 = vsel %vm367, %v349, %v368
        %v374 = vsub.f32 %v360, %v373
        %v375 = vsub.f32 %v366, %v370
        %376 = vrot.lane.b32.xlu0 %v341, 127
        %v377 = vpop.permute.xlu0 %376
        %378 = vrot.lane.b32.xlu0 %v342, 127
        %v379 = vpop.permute.xlu0 %378
        %vm382 = vcmask 121856
        %v383 = vsel %vm382, %v377, 0.0
        %v384 = vsel %vm382, %v379, 0.0
        %385 = vrot.lane.b32.xlu0 %v341, 1
        %v386 = vpop.permute.xlu0 %385
        %387 = vrot.lane.b32.xlu0 %v342, 1
        %v388 = vpop.permute.xlu0 %387
        %vm391 = vcmask 7168
        %v392 = vsel %vm391, 0.0, %v386
        %v393 = vsel %vm391, 0.0, %v388
        %v394 = vsub.f32 %v383, %v392
        %v395 = vsub.f32 %v384, %v393
        %v396 = vmul.f32 %v374, %v374
        %v397 = vmul.f32 %v375, %v375
        %v398 = vmul.f32 %v394, %v394
        %v399 = vmul.f32 %v395, %v395
        %v400 = vadd.f32 %v396, %v398
        %v401 = vadd.f32 %v397, %v399
        %v402 = vadd.f32 %v400, 1e-06
        %v403 = vadd.f32 %v401, 1e-06
        %v404 = vrsqrt.pop %v402
        %v405 = vmul.f32 %v402, %v404
        %vm406 = vcmp.eq.f32.partialorder %v402, inf
        %v407 = vsel %vm406, %v402, %v405
        %vm408 = vcmp.eq.f32.partialorder %v402, 0.0
        %v409 = vand.u32 %v402, 2147483648
        %v410 = vsel %vm408, %v409, %v407
        %v411 = vrsqrt.pop %v403
        %v412 = vmul.f32 %v403, %v411
        %vm413 = vcmp.eq.f32.partialorder %v403, inf
        %v414 = vsel %vm413, %v403, %v412
        %vm415 = vcmp.eq.f32.partialorder %v403, 0.0
        %v416 = vand.u32 %v403, 2147483648
        %v417 = vsel %vm415, %v416, %v414
        %vm418 = vcmask 130048
        %419 = vst.msk [vmem:[%s330] sm:$0xff] %vm418, %v410
        %420 = vst.msk [vmem:[%s330 + $0x8] sm:$0xff] %vm418, %v417
        %s421 = sand.u32 %s160, 1
        %s422 = scalar_lea.sflag [#allocation4], %s421
        %s423 = sand.u32 %s160, 1
        %s424 = smul.addr %s423, 16
        %s425 = scalar_lea.vmem [#allocation8], %s424
        // Predicated region
        $region45: #{tpu_custom_call.1} parent=31 // pred_check
          %p426 = pneg %p170
        $region46: #{tpu_custom_call.1} parent=31 // pred_check_branch
          %428 = sbr.rel (%p426) target = $region48
        $region47: #{tpu_custom_call.1} parent=31 // pred_region
          %s429 = smul.u32 2, %s30
          %s431 = ssub.s32 256, 256
          %432 = vsyncadd %s422, %s431
          %s433 = smul.addr %s29, 2
          %s434 = sadd.s32 %s429, %s433
          %s435 = smul.addr %s28, 6
          %s436 = sadd.s32 %s434, %s435
          %s437 = smul.addr %s436, 128
          %s438 = scalar_lea.hbm %s3, %s437
          %s439 = sshll.u32 %s425, 4
          %s440 = int_to_ptr.vmem [resolvable:$true] %s439
          %445 = dma.vmem_to_hbm [thread:$0]  %s440, 256, %s438, %s422, 128, 128, 8
        $region48: #{tpu_custom_call.1} parent=31 // pred_fallthru
          _
      $region32: #{tpu_custom_call.1} parent=5 // pred_fallthru
        _
      %p446 = scmp.le.s32.totalorder 2, %s18
      // Predicated region
      $region49: #{tpu_custom_call.1} parent=5 // pred_check
        %p447 = pneg %p446
      $region50: #{tpu_custom_call.1} parent=5 // pred_check_branch
        %449 = sbr.rel (%p447) target = $region52
      $region51: #{tpu_custom_call.1} parent=5 // pred_region
        %s450 = ssub.s32 %s18, 2
        // Predicated region
        $region53: #{tpu_custom_call.1} parent=51 // pred_check
          %p451 = pneg %p176
        $region54: #{tpu_custom_call.1} parent=51 // pred_check_branch
          %453 = sbr.rel (%p451) target = $region56
        $region55: #{tpu_custom_call.1} parent=51 // pred_region
          %s454 = sand.u32 %s161, 1
          %s455 = scalar_lea.sflag [#allocation4], %s454
          %s456 = sand.u32 %s161, 1
          %s457 = smul.addr %s456, 16
          %s458 = scalar_lea.vmem [#allocation8], %s457
          %459 = dma.done %s455, 256
        $region56: #{tpu_custom_call.1} parent=51 // pred_fallthru
          _
      $region52: #{tpu_custom_call.1} parent=5 // pred_fallthru
        _
    $region6: #{tpu_custom_call.1} parent=1 // loop_footer
      %s22 = sadd.s32 1, %s18
    $region7: #{tpu_custom_call.1} parent=1 // loop_footer_branch
      %17 = sbr.rel target = $region3
    $region8: #{tpu_custom_call.1} parent=1 // loop_exit
      _
    %460 = vsyncpa [#allocation3], 1
    %s461 = scalar_lea.sflag [#allocation3], 1
    %462 = vsyncpa %s461, 1
    %463 = vsyncpa [#allocation6], 1
    %s464 = scalar_lea.sflag [#allocation6], 1
    %465 = vsyncpa %s464, 1
    %466 = vsyncpa [#allocation4], 1
    %s467 = scalar_lea.sflag [#allocation4], 1
    %468 = vsyncpa %s467, 1

</llo_original>
